<compile_context>
chip_gen: v5e
topology: v5e:2x2
jax: 0.10.0
libtpu: 0.0.40
codegen_flags: <defaults>
</compile_context>

<pallas_src>
import math
import functools

import jax
import jax.numpy as jnp
from jax.experimental import pallas as pl
from jax.experimental.pallas import tpu as pltpu


# ----------------------------------------------------------------------------
# Tiling helpers
# ----------------------------------------------------------------------------
def _round_up(x, m):
    return ((x + m - 1) // m) * m


_MM_TILE_CANDIDATES = (512, 256, 128)


def _mm_tiling(dim, max_single=512):
    """(tile, padded_dim) for one matmul dimension.

    Largest MXU-aligned tile that divides the dim; small dims become one full-extent
    tile; otherwise pad to a multiple of 128 so the (8,128) BlockSpec constraint always
    holds.  Tiles are capped at 512 so double-buffered blocks stay well under the scoped
    VMEM default on v5e/v6e/v7x."""
    for c in _MM_TILE_CANDIDATES:
        if dim >= c and dim % c == 0:
            return c, dim
    if dim <= max_single:
        return dim, dim
    padded = _round_up(dim, 128)
    for c in _MM_TILE_CANDIDATES:
        if padded % c == 0:
            return c, padded
    return 128, padded


def _seq_tiling(seq, max_tile=256):
    """(tile, padded_len) for an attention sequence axis (tile <= 256, sublane aligned)."""
    if seq <= max_tile:
        p = max(_round_up(seq, 8), 8)
        return p, p
    return max_tile, _round_up(seq, max_tile)


# ----------------------------------------------------------------------------
# Tiled matmul + bias (f32 accumulation, bf16-friendly operands)
# ----------------------------------------------------------------------------
def _matmul_bias_kernel(x_ref, w_ref, b_ref, o_ref, acc_ref):
    # blocks: x (tm, tk), w (tk, tn), b (1, tn), o (tm, tn); grid (M/tm, N/tn, K/tk)
    kk = pl.program_id(2)

    @pl.when(kk == 0)
    def _():
        acc_ref[...] = jnp.zeros_like(acc_ref)

    acc_ref[...] += jnp.dot(x_ref[...], w_ref[...],
                            preferred_element_type=jnp.float32)

    @pl.when(kk == pl.num_programs(2) - 1)
    def _():
        o_ref[...] = (acc_ref[...] + b_ref[...]).astype(o_ref.dtype)


def matmul_bias(x, w, b, *, out_dtype=jnp.float32):
    """x:(M,K) @ w:(K,N) + b:(N,) -> (M,N), tiled & pipelined, f32 accumulation."""
    M, K = x.shape
    _, N = w.shape
    tm, Mp = _mm_tiling(M)
    tn, Np = _mm_tiling(N)
    tk, Kp = _mm_tiling(K)
    if Mp != M or Kp != K:
        x = jnp.pad(x, ((0, Mp - M), (0, Kp - K)))
    if Kp != K or Np != N:
        w = jnp.pad(w, ((0, Kp - K), (0, Np - N)))
    if Np != N:
        b = jnp.pad(b, (0, Np - N))

    out = pl.pallas_call(
        _matmul_bias_kernel,
        out_shape=jax.ShapeDtypeStruct((Mp, Np), out_dtype),
        grid_spec=pltpu.PrefetchScalarGridSpec(
            num_scalar_prefetch=0,
            grid=(Mp // tm, Np // tn, Kp // tk),
            in_specs=[
                pl.BlockSpec((tm, tk), lambda i, j, kk: (i, kk)),
                pl.BlockSpec((tk, tn), lambda i, j, kk: (kk, j)),
                pl.BlockSpec((1, tn), lambda i, j, kk: (0, j)),
            ],
            out_specs=pl.BlockSpec((tm, tn), lambda i, j, kk: (i, j)),
            scratch_shapes=[pltpu.VMEM((tm, tn), jnp.float32)],
        ),
        compiler_params=pltpu.CompilerParams(
            dimension_semantics=("parallel", "parallel", "arbitrary"),
            vmem_limit_bytes=32 * 1024 * 1024),
    )(x, w, b.reshape(1, Np))

    if Mp != M or Np != N:
        out = out[:M, :N]
    return out


# ----------------------------------------------------------------------------
# Flash (online-softmax) multi-head attention.
# Heads live contiguously in the last dim (D = H*Dh); no head transpose needed.
# ----------------------------------------------------------------------------
def _flash_mha_kernel(q_ref, k_ref, v_ref, bias_ref, o_ref,
                      m_sc, l_sc, acc_sc, *, n_heads, scale):
    # blocks: q (1, tq, D) bf16 ; k,v (1, tk, D) bf16 ; bias (1, 1, tk) f32
    #         o (1, tq, D) ; scratch m,l (H, tq, 1) f32 ; acc (tq, D) f32
    # grid  : (B, Sq/tq, Sk/tk)  -- Sk axis LAST ("arbitrary")
    kv = pl.program_id(2)
    d_model = q_ref.shape[-1]
    d_head = d_model // n_heads

    @pl.when(kv == 0)
    def _():
        m_sc[...] = jnp.full_like(m_sc, -jnp.inf)
        l_sc[...] = jnp.zeros_like(l_sc)
        acc_sc[...] = jnp.zeros_like(acc_sc)

    bias = bias_ref[0]                                    # (1, tk) additive mask bias

    for h in range(n_heads):                              # static unroll over heads
        sl = slice(h * d_head, (h + 1) * d_head)
        q_h = q_ref[0, :, sl] * scale                     # fold 1/sqrt(Dh) into q (bf16)
        k_h = k_ref[0, :, sl]                             # (tk, Dh) bf16
        v_h = v_ref[0, :, sl]                             # (tk, Dh) bf16

        # QK^T on the MXU with f32 accumulation.
        s = jax.lax.dot_general(q_h, k_h, (((1,), (1,)), ((), ())),
                                preferred_element_type=jnp.float32)   # (tq, tk)
        s = s + bias

        # Online softmax update (f32 math).
        m_prev = m_sc[h]                                  # (tq, 1)
        m_new = jnp.maximum(m_prev, jnp.max(s, axis=-1, keepdims=True))
        alpha = jnp.exp(m_prev - m_new)
        p = jnp.exp(s - m_new)                            # (tq, tk) f32

        l_sc[h] = alpha * l_sc[h] + jnp.sum(p, axis=-1, keepdims=True)
        pv = jnp.dot(p.astype(v_h.dtype), v_h,            # PV on the MXU, f32 acc
                     preferred_element_type=jnp.float32)  # (tq, Dh)
        acc_sc[:, sl] = alpha * acc_sc[:, sl] + pv
        m_sc[h] = m_new

    @pl.when(kv == pl.num_programs(2) - 1)
    def _():
        # Per-head normalization + direct stores into the merged (tq, D) output slab.
        for h in range(n_heads):
            sl = slice(h * d_head, (h + 1) * d_head)
            inv = pl.reciprocal(l_sc[h], approx=False)
            o_ref[0, :, sl] = (acc_sc[:, sl] * inv).astype(o_ref.dtype)


def flash_mh_attention(q, k, v, bias, *, n_heads, scale, out_dtype=jnp.bfloat16):
    """q:(B,Sq,D), k/v:(B,Sk,D) with heads contiguous in the last dim; bias:(B,1,Sk)
    additive mask (0 keep / -1e9 drop).  Returns (B,Sq,D) with heads already merged."""
    B, Sq, D = q.shape
    Sk = k.shape[1]
    tq, Sqp = _seq_tiling(Sq)
    tk, Skp = _seq_tiling(Sk)
    if Sqp != Sq:
        q = jnp.pad(q, ((0, 0), (0, Sqp - Sq), (0, 0)))
    if Skp != Sk:
        k = jnp.pad(k, ((0, 0), (0, Skp - Sk), (0, 0)))
        v = jnp.pad(v, ((0, 0), (0, Skp - Sk), (0, 0)))
        bias = jnp.pad(bias, ((0, 0), (0, 0), (0, Skp - Sk)),
                       constant_values=-1e9)              # padded keys are masked out

    out = pl.pallas_call(
        functools.partial(_flash_mha_kernel, n_heads=n_heads, scale=scale),
        out_shape=jax.ShapeDtypeStruct((B, Sqp, D), out_dtype),
        grid_spec=pltpu.PrefetchScalarGridSpec(
            num_scalar_prefetch=0,
            grid=(B, Sqp // tq, Skp // tk),
            in_specs=[
                pl.BlockSpec((1, tq, D), lambda b, qi, ki: (b, qi, 0)),
                pl.BlockSpec((1, tk, D), lambda b, qi, ki: (b, ki, 0)),
                pl.BlockSpec((1, tk, D), lambda b, qi, ki: (b, ki, 0)),
                pl.BlockSpec((1, 1, tk), lambda b, qi, ki: (b, 0, ki)),
            ],
            out_specs=pl.BlockSpec((1, tq, D), lambda b, qi, ki: (b, qi, 0)),
            scratch_shapes=[
                pltpu.VMEM((n_heads, tq, 1), jnp.float32),   # running max  m
                pltpu.VMEM((n_heads, tq, 1), jnp.float32),   # running sum  l
                pltpu.VMEM((tq, D), jnp.float32),            # context accumulator
            ],
        ),
        compiler_params=pltpu.CompilerParams(
            dimension_semantics=("parallel", "parallel", "arbitrary"),
            vmem_limit_bytes=32 * 1024 * 1024),
    )(q, k, v, bias)

    if Sqp != Sq:
        out = out[:, :Sq, :]
    return out


# ----------------------------------------------------------------------------
# Parameters (PyTorch nn.Linear default init; QKV weights concatenated)
# ----------------------------------------------------------------------------
def init_params(key, d_model):
    ks = jax.random.split(key, 4)
    bound = 1.0 / math.sqrt(d_model)

    def uni(k, shape):
        return jax.random.uniform(k, shape, jnp.float32, -bound, bound)

    return {
        "w_qkv": uni(ks[0], (d_model, 3 * d_model)),   # [Wq | Wk | Wv]
        "b_qkv": uni(ks[1], (3 * d_model,)),
        "w_o":   uni(ks[2], (d_model, d_model)),
        "b_o":   uni(ks[3], (d_model,)),
    }


# ----------------------------------------------------------------------------
# MHAttn forward
# ----------------------------------------------------------------------------
def mhattn_forward(query, key, value, mask, params, n_heads):
    B, Sq, D = query.shape
    Sk = key.shape[1]
    assert D % n_heads == 0
    scale = 1.0 / math.sqrt(D // n_heads)

    # bf16 MXU operands everywhere; accumulation stays f32 inside the kernels.
    w_qkv = params["w_qkv"].astype(jnp.bfloat16)
    w_o = params["w_o"].astype(jnp.bfloat16)
    b_qkv = params["b_qkv"]
    b_o = params["b_o"]

    q_in = query.astype(jnp.bfloat16).reshape(B * Sq, D)
    if (query is key) and (key is value):
        # Self-attention fast path: one fused QKV projection (activation read once).
        qkv = matmul_bias(q_in, w_qkv, b_qkv, out_dtype=jnp.bfloat16)      # (B*Sq, 3D)
        q2d, k2d, v2d = jnp.split(qkv, 3, axis=-1)
        Sk = Sq
    else:
        k_in = key.astype(jnp.bfloat16).reshape(B * Sk, D)
        v_in = value.astype(jnp.bfloat16).reshape(B * Sk, D)
        wq, wk, wv = jnp.split(w_qkv, 3, axis=-1)
        bq, bk, bv = jnp.split(b_qkv, 3, axis=-1)
        q2d = matmul_bias(q_in, wq, bq, out_dtype=jnp.bfloat16)
        k2d = matmul_bias(k_in, wk, bk, out_dtype=jnp.bfloat16)
        v2d = matmul_bias(v_in, wv, bv, out_dtype=jnp.bfloat16)

    # No split_heads transpose: the attention kernel consumes (B, S, D) directly and
    # slices each head's Dh columns in-kernel.
    qh = q2d.reshape(B, Sq, D)
    kh = k2d.reshape(B, Sk, D)
    vh = v2d.reshape(B, Sk, D)

    # Mask -> additive bias (0 keep / -1e9 drop), computed once in the wrapper.
    if mask is None:
        bias = jnp.zeros((B, 1, Sk), jnp.float32)
    else:
        assert mask.size == B * Sk, "mask must broadcast as (B, Sk); per-query masks unsupported"
        bias = jnp.where(mask.reshape(B, 1, Sk) > 0, 0.0, -1e9).astype(jnp.float32)

    ctx = flash_mh_attention(qh, kh, vh, bias, n_heads=n_heads, scale=scale,
                             out_dtype=jnp.bfloat16)                       # (B, Sq, D)

    out = matmul_bias(ctx.reshape(B * Sq, D), w_o, b_o, out_dtype=jnp.float32)
    return out.reshape(B, Sq, D)


# ----------------------------------------------------------------------------
# Pure-JAX reference (f32) for a tolerance check
# ----------------------------------------------------------------------------
def _reference_forward(query, key, value, mask, params, n_heads):
    B, Sq, D = query.shape
    Sk = key.shape[1]
    d_head = D // n_heads
    wq, wk, wv = jnp.split(params["w_qkv"], 3, axis=-1)
    bq, bk, bv = jnp.split(params["b_qkv"], 3, axis=-1)

    def proj(x, w, b, S):
        y = x.reshape(-1, D) @ w + b
        return y.reshape(B, S, n_heads, d_head).transpose(0, 2, 1, 3)

    q = proj(query, wq, bq, Sq)
    k = proj(key, wk, bk, Sk)
    v = proj(value, wv, bv, Sk)
    s = jnp.einsum("bhqd,bhkd->bhqk", q, k) / math.sqrt(d_head)
    if mask is not None:
        s = jnp.where(mask.reshape(B, 1, 1, Sk) > 0, s, -1e9)
    p = jax.nn.softmax(s, axis=-1)
    ctx = jnp.einsum("bhqk,bhkd->bhqd", p, v).transpose(0, 2, 1, 3).reshape(B, Sq, D)
    return ctx @ params["w_o"] + params["b_o"]


# ----------------------------------------------------------------------------
# Main
# ----------------------------------------------------------------------------
if __name__ == "__main__":
    B, S, D, N_HEADS = 2, 8, 32, 4

    key = jax.random.PRNGKey(0)
    k_x, k_p = jax.random.split(key)
    x = jax.random.normal(k_x, (B, S, D), jnp.float32)
    # mask: first 6 tokens valid in batch 0, all 8 valid in batch 1 (1 = keep)
    mask = jnp.array([[1, 1, 1, 1, 1, 1, 0, 0],
                      [1, 1, 1, 1, 1, 1, 1, 1]], dtype=jnp.float32)
    params = init_params(k_p, D)

    out = mhattn_forward(x, x, x, mask, params, N_HEADS)
    out = jax.block_until_ready(out)

    assert out.shape == (B, S, D)
    assert bool(jnp.all(jnp.isfinite(out)))
    ref = _reference_forward(x, x, x, mask, params, N_HEADS)
    assert bool(jnp.allclose(out, ref, atol=7.5e-2, rtol=7.5e-2)), float(
        jnp.max(jnp.abs(out - ref)))
    print("KERNEL_OK")
</pallas_src>

<mosaic_0001>
module attributes {stable_mosaic.version = 11 : i64} {
  func.func @_matmul_bias_kernel(%arg0: i32, %arg1: i32, %arg2: i32, %arg3: memref<16x32xbf16, #tpu.memory_space<vmem>>, %arg4: memref<32x96xbf16, #tpu.memory_space<vmem>>, %arg5: memref<1x96xf32, #tpu.memory_space<vmem>>, %arg6: memref<16x96xbf16, #tpu.memory_space<vmem>>, %arg7: memref<16x96xf32, #tpu.memory_space<vmem>>) attributes {dimension_semantics = [#tpu.dimension_semantics<parallel>, #tpu.dimension_semantics<parallel>, #tpu.dimension_semantics<arbitrary>], iteration_bounds = array<i64: 1, 1, 1>, scalar_prefetch = 0 : i64, scratch_operands = 1 : i64, tpu.core_type = #tpu.core_type<tc>, window_params = [{transform_indices = @transform_0, window_bounds = array<i64: 16, 32>}, {transform_indices = @transform_1, window_bounds = array<i64: 32, 96>}, {transform_indices = @transform_2, window_bounds = array<i64: 1, 96>}, {transform_indices = @transform_3, window_bounds = array<i64: 16, 96>}]} {
    %c0_i32 = arith.constant 0 : i32
    %0 = arith.cmpi eq, %arg2, %c0_i32 : i32
    %1 = arith.extui %0 : i1 to i32
    %c0_i32_0 = arith.constant 0 : i32
    %2 = arith.cmpi ne, %1, %c0_i32_0 : i32
    scf.if %2 {
      %cst_10 = arith.constant 0.000000e+00 : f32
      %12 = vector.broadcast %cst_10 : f32 to vector<16x96xf32>
      %c0_11 = arith.constant 0 : index
      %c0_12 = arith.constant 0 : index
      %13 = vector.load %arg7[%c0_11, %c0_12] : memref<16x96xf32, #tpu.memory_space<vmem>>, vector<16x96xf32>
      tpu.vector_store %arg7[%c0_11, %c0_12], %12 {strides = array<i32>} : memref<16x96xf32, #tpu.memory_space<vmem>>, vector<16x96xf32>,
    } else {
    }
    %c0 = arith.constant 0 : index
    %c0_1 = arith.constant 0 : index
    %3 = vector.load %arg7[%c0, %c0_1] : memref<16x96xf32, #tpu.memory_space<vmem>>, vector<16x96xf32>
    %c0_2 = arith.constant 0 : index
    %c0_3 = arith.constant 0 : index
    %4 = vector.load %arg3[%c0_2, %c0_3] : memref<16x32xbf16, #tpu.memory_space<vmem>>, vector<16x32xbf16>
    %c0_4 = arith.constant 0 : index
    %c0_5 = arith.constant 0 : index
    %5 = vector.load %arg4[%c0_4, %c0_5] : memref<32x96xbf16, #tpu.memory_space<vmem>>, vector<32x96xbf16>
    %cst = arith.constant dense<0.000000e+00> : vector<16x96xf32>
    %6 = tpu.matmul %4, %5, %cst {dimension_numbers = #tpu.dot_dimension_numbers<[1], [0], [0], [1], [0, 0, 1, 1], [], []>} : vector<16x32xbf16>, vector<32x96xbf16>, vector<16x96xf32> -> vector<16x96xf32>
    %7 = arith.addf %3, %6 : vector<16x96xf32>
    %c0_6 = arith.constant 0 : index
    %c0_7 = arith.constant 0 : index
    %8 = vector.load %arg7[%c0_6, %c0_7] : memref<16x96xf32, #tpu.memory_space<vmem>>, vector<16x96xf32>
    tpu.vector_store %arg7[%c0_6, %c0_7], %7 {strides = array<i32>} : memref<16x96xf32, #tpu.memory_space<vmem>>, vector<16x96xf32>,
    %c0_i32_8 = arith.constant 0 : i32
    %9 = arith.cmpi eq, %arg2, %c0_i32_8 : i32
    %10 = arith.extui %9 : i1 to i32
    %c0_i32_9 = arith.constant 0 : i32
    %11 = arith.cmpi ne, %10, %c0_i32_9 : i32
    scf.if %11 {
      %c0_10 = arith.constant 0 : index
      %c0_11 = arith.constant 0 : index
      %12 = vector.load %arg7[%c0_10, %c0_11] : memref<16x96xf32, #tpu.memory_space<vmem>>, vector<16x96xf32>
      %c0_12 = arith.constant 0 : index
      %c0_13 = arith.constant 0 : index
      %13 = vector.load %arg5[%c0_12, %c0_13] : memref<1x96xf32, #tpu.memory_space<vmem>>, vector<1x96xf32>
      %14 = vector.broadcast %13 : vector<1x96xf32> to vector<16x96xf32>
      %15 = arith.addf %12, %14 : vector<16x96xf32>
      %16 = arith.truncf %15 : vector<16x96xf32> to vector<16x96xbf16>
      %c0_14 = arith.constant 0 : index
      %c0_15 = arith.constant 0 : index
      %17 = vector.load %arg6[%c0_14, %c0_15] : memref<16x96xbf16, #tpu.memory_space<vmem>>, vector<16x96xbf16>
      tpu.vector_store %arg6[%c0_14, %c0_15], %16 {strides = array<i32>} : memref<16x96xbf16, #tpu.memory_space<vmem>>, vector<16x96xbf16>,
    } else {
    }
    return
  }
  func.func @transform_0(%arg0: i32, %arg1: i32, %arg2: i32) -> (i32, i32) {
    %c0_i32 = arith.constant 0 : i32
    return %arg0, %arg2 : i32, i32
  }
  func.func @transform_1(%arg0: i32, %arg1: i32, %arg2: i32) -> (i32, i32) {
    %c0_i32 = arith.constant 0 : i32
    return %arg2, %arg1 : i32, i32
  }
  func.func @transform_2(%arg0: i32, %arg1: i32, %arg2: i32) -> (i32, i32) {
    %c0_i32 = arith.constant 0 : i32
    %c0_i32_0 = arith.constant 0 : i32
    return %c0_i32, %arg1 : i32, i32
  }
  func.func @transform_3(%arg0: i32, %arg1: i32, %arg2: i32) -> (i32, i32) {
    %c0_i32 = arith.constant 0 : i32
    return %arg0, %arg1 : i32, i32
  }
}

</mosaic_0001>

<llo_original>
// kernel: tpu_custom_call.1
$region0: #{tpu_custom_call.1}
  #allocation0 [shape = 'u32[]', space=smem, size = 0x4, offset = 0x4, fixed_abs, tag = 'smem constant byte address 0x4 - core index']
  #allocation1 [shape = 'u32[72,128]{1,0:T(1,128)}', space=vmem, size = 0x9000, scoped, tag = 'internal scratch']
  #allocation2 [shape = 'f32[16,96]{1,0:T(8,128)}', space=vmem, size = 0x2000, scoped, tag = 'scratch operand']
  %s0 = inlined_call_operand.hbm [shape: bf16[16,32], index: 0, kind: input, shape index: {}]
  %s1 = inlined_call_operand.hbm [shape: bf16[32,96], index: 1, kind: input, shape index: {}]
  %s2 = inlined_call_operand.vmem [shape: f32[1,96], index: 2, kind: input, shape index: {}]
  %s3 = inlined_call_operand.hbm [shape: bf16[16,96], index: 3, kind: output, shape index: {}]
  %s4 = sld [smem:[#allocation0]]
  $region38: #{tpu_custom_call.1} parent=0
    _
  %s6 = ssub.s32 1, %s4
  %s7 = scalar_select 0, %s6, %s4
  $region1: #{tpu_custom_call.1} parent=0
    #allocation3 [shape = 'u8[4096]{0}', space=vmem, size = 0x1000, scoped, tag = 'input window, operand 0, single buffered']
    #allocation4 [shape = 's32[1]{0}', space=sflag, size = 0x4, scoped, tag = 'scoped memory for tpu_custom_call.1']
    #allocation5 [shape = 's32[1]{0}', space=sflag, size = 0x4, scoped, tag = 'scoped memory for tpu_custom_call.1']
    #allocation6 [shape = 'u8[8192]{0}', space=vmem, size = 0x2000, scoped, tag = 'input window, operand 1, single buffered']
    #allocation7 [shape = 's32[1]{0}', space=sflag, size = 0x4, scoped, tag = 'scoped memory for tpu_custom_call.1']
    #allocation8 [shape = 'u8[4096]{0}', space=vmem, size = 0x1000, scoped, tag = 'output window, operand 0, single buffered']
    %8 = vsyncpa [#allocation4], 0
    %9 = vsyncpa [#allocation7], 0
    %10 = vsyncpa [#allocation5], 0
    // Predicated region
    $region2: #{tpu_custom_call.1} parent=1 // pred_check
      _
    $region3: #{tpu_custom_call.1} parent=1 // pred_check_branch
      %12 = sbr.rel (0) target = $region5
    $region4: #{tpu_custom_call.1} parent=1 // pred_region
      %14 = vsyncadd [#allocation4], 0
      %s15 = sshll.u32 %s0, 4
      %s16 = int_to_ptr.hbm [resolvable:$true] %s15
      %s17 = sshll.u32 [#allocation3], 4
      %s18 = int_to_ptr.vmem [resolvable:$true] %s17
      %23 = dma.hbm_to_vmem [thread:$0]  %s16, 128, %s18, [#allocation4], 64, 64, 4
    $region5: #{tpu_custom_call.1} parent=1 // pred_fallthru
      _
    // Predicated region
    $region6: #{tpu_custom_call.1} parent=1 // pred_check
      _
    $region7: #{tpu_custom_call.1} parent=1 // pred_check_branch
      %25 = sbr.rel (0) target = $region9
    $region8: #{tpu_custom_call.1} parent=1 // pred_region
      %27 = vsyncadd [#allocation7], 0
      %s28 = sshll.u32 %s1, 4
      %s29 = int_to_ptr.hbm [resolvable:$true] %s28
      %s30 = sshll.u32 [#allocation6], 4
      %s31 = int_to_ptr.vmem [resolvable:$true] %s30
      %36 = dma.hbm_to_vmem [thread:$0]  %s29, 256, %s31, [#allocation7], 64, 64, 4
    $region9: #{tpu_custom_call.1} parent=1 // pred_fallthru
      _
    // Predicated region
    $region10: #{tpu_custom_call.1} parent=1 // pred_check
      _
    $region11: #{tpu_custom_call.1} parent=1 // pred_check_branch
      %38 = sbr.rel (0) target = $region13
    $region12: #{tpu_custom_call.1} parent=1 // pred_region
      _
    $region13: #{tpu_custom_call.1} parent=1 // pred_fallthru
      _
    // Predicated region
    $region14: #{tpu_custom_call.1} parent=1 // pred_check
      _
    $region15: #{tpu_custom_call.1} parent=1 // pred_check_branch
      %40 = sbr.rel (0) target = $region17
    $region16: #{tpu_custom_call.1} parent=1 // pred_region
      %42 = dma.done [#allocation4], 128
    $region17: #{tpu_custom_call.1} parent=1 // pred_fallthru
      _
    // Predicated region
    $region18: #{tpu_custom_call.1} parent=1 // pred_check
      _
    $region19: #{tpu_custom_call.1} parent=1 // pred_check_branch
      %44 = sbr.rel (0) target = $region21
    $region20: #{tpu_custom_call.1} parent=1 // pred_region
      %46 = dma.done [#allocation7], 256
    $region21: #{tpu_custom_call.1} parent=1 // pred_fallthru
      _
    %p48 = scmp.eq.s32.totalorder 0, 0
    // Predicated region
    $region22: #{tpu_custom_call.1} parent=1 // pred_check
      %p49 = pneg %p48
    $region23: #{tpu_custom_call.1} parent=1 // pred_check_branch
      %51 = sbr.rel (%p49) target = $region25
    $region24: #{tpu_custom_call.1} parent=1 // pred_region
      %vm52 = vcmask 785408
      %53 = vst.msk [vmem:[#allocation2] sm:$0xff] %vm52, 0.0
      %54 = vst.msk [vmem:[#allocation2 + $0x8] sm:$0xff] %vm52, 0.0
    $region25: #{tpu_custom_call.1} parent=1 // pred_fallthru
      _
    %v55 = vld [vmem:[#allocation2] sm:$0xff]
    %v56 = vld [vmem:[#allocation2 + $0x8] sm:$0xff]
    %v57 = vld [vmem:[#allocation3] sm:$0xf]
    %v58 = vld [vmem:[#allocation3 + $0x4] sm:$0xf]
    %v59 = vld [vmem:[#allocation6] sm:$0xf]
    %v60 = vld [vmem:[#allocation6 + $0x4] sm:$0xf]
    %v61 = vld [vmem:[#allocation6 + $0x8] sm:$0xf]
    %v62 = vld [vmem:[#allocation6 + $0xc] sm:$0xf]
    %v65 = vunpack.c.l.b16 %v57
    %v66 = vunpack.c.l.b16 %v58
    %v67 = vpack.c.b16 %v66, %v65
    %v72 = vunpack.c.l.b16 %v59
    %v73 = vunpack.c.l.b16 %v60
    %v74 = vunpack.c.l.b16 %v61
    %v75 = vunpack.c.l.b16 %v62
    %v76 = vpack.c.b16 %v73, %v72
    %v77 = vpack.c.b16 %v75, %v74
    %vm80 = vcmask 261120
    %v82 = vsel %vm80, %v67, 0
    %84 = vmatpush.bf16.msra.mxu0 0
    %85 = vmatpush.bf16.msra.mxu0 0
    %86 = vmatpush.bf16.msra.mxu0 0
    %87 = vmatpush.bf16.msra.mxu0 0
    %88 = vmatpush.bf16.msra.mxu0 0
    %89 = vmatpush.bf16.msra.mxu0 0
    %90 = vmatpush.bf16.msra.mxu0 %v77
    %91 = vmatpush.bf16.msra.mxu0 %v76
    %92 = vmatmul.bf16.gmra.mxu0 %v82
    %v93 = vpop.f32.mrf.mxu0
    %v94 = vadd.f32 0.0, %v93
    %v95 = vpop.f32.mrf.mxu0
    %v96 = vadd.f32 0.0, %v95
    %97 = vdwg.mxu0
    %v98 = vadd.f32 %v55, %v94
    %v99 = vadd.f32 %v56, %v96
    %vm100 = vcmask 785408
    %101 = vst.msk [vmem:[#allocation2] sm:$0xff] %vm100, %v98
    %102 = vst.msk [vmem:[#allocation2 + $0x8] sm:$0xff] %vm100, %v99
    // Predicated region
    $region26: #{tpu_custom_call.1} parent=1 // pred_check
      %p103 = pneg %p48
    $region27: #{tpu_custom_call.1} parent=1 // pred_check_branch
      %105 = sbr.rel (%p103) target = $region29
    $region28: #{tpu_custom_call.1} parent=1 // pred_region
      %v106 = vld [vmem:[#allocation2] sm:$0xff]
      %v107 = vld [vmem:[#allocation2 + $0x8] sm:$0xff]
      %v108 = vld [vmem:[%s2] sm:$0x1]
      %v110 = vperm.slane %v108, 0
      %v112 = vadd.f32 %v106, %v110
      %v113 = vadd.f32 %v107, %v110
      %v114 = vpack.c.bf16 %v112, %v112
      %v115 = vpack.c.bf16 %v113, %v113
      %vm116 = vcmask 781312
      %117 = vst.msk [vmem:[#allocation8] sm:$0xf] %vm116, %v114
      %118 = vst.msk [vmem:[#allocation8 + $0x4] sm:$0xf] %vm116, %v115
    $region29: #{tpu_custom_call.1} parent=1 // pred_fallthru
      _
    // Predicated region
    $region30: #{tpu_custom_call.1} parent=1 // pred_check
      _
    $region31: #{tpu_custom_call.1} parent=1 // pred_check_branch
      %120 = sbr.rel (0) target = $region33
    $region32: #{tpu_custom_call.1} parent=1 // pred_region
      %122 = vsyncadd [#allocation5], 0
      %s123 = sshll.u32 [#allocation8], 4
      %s124 = int_to_ptr.vmem [resolvable:$true] %s123
      %s125 = sshll.u32 %s3, 4
      %s126 = int_to_ptr.hbm [resolvable:$true] %s125
      %131 = dma.vmem_to_hbm [thread:$0]  %s124, 128, %s126, [#allocation5], 64, 64, 4
    $region33: #{tpu_custom_call.1} parent=1 // pred_fallthru
      _
    // Predicated region
    $region34: #{tpu_custom_call.1} parent=1 // pred_check
      _
    $region35: #{tpu_custom_call.1} parent=1 // pred_check_branch
      %133 = sbr.rel (0) target = $region37
    $region36: #{tpu_custom_call.1} parent=1 // pred_region
      %135 = dma.done [#allocation5], 128
    $region37: #{tpu_custom_call.1} parent=1 // pred_fallthru
      _
    %136 = vsyncpa [#allocation4], 1
    %137 = vsyncpa [#allocation7], 1
    %138 = vsyncpa [#allocation5], 1

</llo_original>
